<compile_context>
chip_gen: v5e
topology: v5e:2x2
jax: 0.10.0
libtpu: 0.0.40
codegen_flags: <defaults>
</compile_context>

<pallas_src>
import functools

import jax
import jax.numpy as jnp
from jax.experimental import pallas as pl
from jax.experimental.pallas import tpu as pltpu


def _awl_kernel(x_ref, terms_ref, sum_ref):
    """Weighted-loss terms + reduction on a single (tiny) vreg.

    x_ref     : (2, num) f32 VMEM   (row 0 = params, row 1 = losses)
    terms_ref : (1, num) f32 VMEM   (per-task terms)
    sum_ref   : (1, 1)   f32 SMEM   (scalar sum of the terms)
    """
    x = x_ref[...]                      # (2, num)
    p = x[0:1, :]                       # (1, num)
    loss = x[1:2, :]                    # (1, num)

    p2 = p * p
    # 0.5 / p^2 * loss + log(1 + p^2); exact reciprocal keeps the 1e-5 tolerance.
    term = 0.5 * loss * pl.reciprocal(p2) + jnp.log1p(p2)
    term = jnp.maximum(term, 0.0)       # nn.ReLU() in the original module

    terms_ref[...] = term
    sum_ref[0, 0] = jnp.sum(term)


@functools.partial(jax.jit, static_argnames=("num",))
def automatic_weighted_loss(params, losses, *, num):
    """params: (num,) f32 learnable weights; losses: (num,) f32 scalar losses."""
    assert params.shape == (num,)
    assert losses.shape == (num,)

    # Single packed (2, num) f32 input -> one tiny DMA, no padding.
    packed = jnp.stack([params, losses]).astype(jnp.float32)

    terms, loss_sum = pl.pallas_call(
        _awl_kernel,
        out_shape=(
            jax.ShapeDtypeStruct((1, num), jnp.float32),
            jax.ShapeDtypeStruct((1, 1), jnp.float32),
        ),
        in_specs=[
            pl.BlockSpec(memory_space=pltpu.MemorySpace.VMEM),
        ],
        out_specs=(
            pl.BlockSpec(memory_space=pltpu.MemorySpace.VMEM),
            pl.BlockSpec(memory_space=pltpu.MemorySpace.SMEM),
        ),
    )(packed)

    loss_indentify = terms[0]           # (num,) f32, matches torch loss_indentify
    return loss_sum[0, 0], loss_indentify


def _reference(params, losses):
    p2 = params ** 2
    terms = jnp.maximum(0.5 / p2 * losses + jnp.log1p(p2), 0.0)
    return jnp.sum(terms), terms


if __name__ == "__main__":
    num = 3
    # Deterministic parameter init: module's __init__ uses torch.ones(num).
    params = jnp.ones((num,), dtype=jnp.float32)

    # Deterministic example "losses" (the *x scalar inputs to forward).
    key = jax.random.PRNGKey(0)
    losses = jax.random.uniform(key, (num,), dtype=jnp.float32, minval=0.1, maxval=2.0)

    loss_sum, loss_indentify = automatic_weighted_loss(params, losses, num=num)
    loss_sum = jax.block_until_ready(loss_sum)
    loss_indentify = jax.block_until_ready(loss_indentify)

    ref_sum, ref_terms = _reference(params, losses)
    assert jnp.allclose(loss_sum, ref_sum, rtol=1e-5, atol=1e-5), (loss_sum, ref_sum)
    assert jnp.allclose(loss_indentify, ref_terms, rtol=1e-5, atol=1e-5)

    print("KERNEL_OK")
</pallas_src>

<mosaic_0001>
module attributes {stable_mosaic.version = 11 : i64} {
  func.func @_awl_kernel(%arg0: memref<2x3xf32, #tpu.memory_space<vmem>>, %arg1: memref<1x3xf32, #tpu.memory_space<vmem>>, %arg2: memref<1x1xf32, #tpu.memory_space<smem>>) attributes {dimension_semantics = [], scalar_prefetch = 0 : i64, scratch_operands = 0 : i64, tpu.core_type = #tpu.core_type<tc>} {
    %c0 = arith.constant 0 : index
    %c0_0 = arith.constant 0 : index
    %0 = vector.load %arg0[%c0, %c0_0] : memref<2x3xf32, #tpu.memory_space<vmem>>, vector<2x3xf32>
    %1 = vector.extract_strided_slice %0 {offsets = [0, 0], sizes = [1, 3], strides = [1, 1]} : vector<2x3xf32> to vector<1x3xf32>
    %2 = vector.extract_strided_slice %0 {offsets = [1, 0], sizes = [1, 3], strides = [1, 1]} : vector<2x3xf32> to vector<1x3xf32>
    %3 = arith.mulf %1, %1 : vector<1x3xf32>
    %cst = arith.constant 5.000000e-01 : f32
    %4 = vector.broadcast %cst : f32 to vector<1x3xf32>
    %5 = arith.mulf %4, %2 : vector<1x3xf32>
    %6 = tpu.reciprocal %3 : vector<1x3xf32> -> vector<1x3xf32>
    %7 = arith.mulf %5, %6 : vector<1x3xf32>
    %8 = math.log1p %3 : vector<1x3xf32>
    %9 = arith.addf %7, %8 : vector<1x3xf32>
    %cst_1 = arith.constant 0.000000e+00 : f32
    %10 = vector.broadcast %cst_1 : f32 to vector<1x3xf32>
    %11 = arith.maximumf %9, %10 : vector<1x3xf32>
    %c0_2 = arith.constant 0 : index
    %c0_3 = arith.constant 0 : index
    %12 = vector.load %arg1[%c0_2, %c0_3] : memref<1x3xf32, #tpu.memory_space<vmem>>, vector<1x3xf32>
    tpu.vector_store %arg1[%c0_2, %c0_3], %11 {strides = array<i32>} : memref<1x3xf32, #tpu.memory_space<vmem>>, vector<1x3xf32>,
    %13 = vector.shape_cast %11 : vector<1x3xf32> to vector<1x1x3xf32>
    %cst_4 = arith.constant dense<0.000000e+00> : vector<1xf32>
    %14 = vector.multi_reduction <add>, %13, %cst_4 [1, 2] : vector<1x1x3xf32> to vector<1xf32>
    %15 = vector.shape_cast %14 : vector<1xf32> to vector<1x1x1xf32>
    %16 = vector.extract %15[0, 0, 0] : f32 from vector<1x1x1xf32>
    %c0_5 = arith.constant 0 : index
    %c0_6 = arith.constant 0 : index
    %17 = memref.load %arg2[%c0_5, %c0_6] : memref<1x1xf32, #tpu.memory_space<smem>>
    memref.store %16, %arg2[%c0_5, %c0_6] : memref<1x1xf32, #tpu.memory_space<smem>>
    return
  }
}

</mosaic_0001>

<llo_original>
// kernel: automatic_weighted_loss.1
$region0: #{automatic_weighted_loss.1}
  #allocation0 [shape = 'u32[]', space=smem, size = 0x4, offset = 0x4, fixed_abs, tag = 'smem constant byte address 0x4 - core index']
  #allocation1 [shape = 'u32[72,128]{1,0:T(1,128)}', space=vmem, size = 0x9000, scoped, tag = 'internal scratch']
  %s0 = inlined_call_operand.vmem [shape: f32[2,3], index: 0, kind: input, shape index: {}]
  %s1 = inlined_call_operand.hbm [shape: f32[1,3], index: 1, kind: output, shape index: {0}]
  %s2 = inlined_call_operand.hbm [shape: f32[1,1], index: 2, kind: output, shape index: {1}]
  %3 = xla_tuple %s1, %s2
  %s4 = sld [smem:[#allocation0]]
  $region22: #{automatic_weighted_loss.1} parent=0
    _
  %s6 = ssub.s32 1, %s4
  %s7 = scalar_select 0, %s6, %s4
  $region1: #{automatic_weighted_loss.1} parent=0
    #allocation2 [shape = 'u8[512]{0}', space=vmem, size = 0x400, scoped, tag = 'output window, operand 0, single buffered']
    #allocation3 [shape = 's32[1]{0}', space=sflag, size = 0x4, scoped, tag = 'scoped memory for automatic_weighted_loss.1']
    #allocation4 [shape = 's32[1]{0}', space=sflag, size = 0x4, scoped, tag = 'scoped memory for automatic_weighted_loss.1']
    #allocation5 [shape = 'u8[512]{0}', space=smem, size = 0x200, scoped, tag = 'output window, operand 1, single buffered']
    %8 = vsyncpa [#allocation3], 0
    %9 = vsyncpa [#allocation4], 0
    // Predicated region
    $region2: #{automatic_weighted_loss.1} parent=1 // pred_check
      _
    $region3: #{automatic_weighted_loss.1} parent=1 // pred_check_branch
      %11 = sbr.rel (0) target = $region5
    $region4: #{automatic_weighted_loss.1} parent=1 // pred_region
      _
    $region5: #{automatic_weighted_loss.1} parent=1 // pred_fallthru
      _
    %v12 = vld [vmem:[%s0] sm:$0x3]
    %v13 = vmul.f32 %v12, %v12
    %v14 = vmul.f32 %v12, 0.5
    %v15 = vrcp.pop %v13
    %v16 = vmul.f32 %v13, %v15
    %v17 = vsub.f32 1.0, %v16
    %v18 = vmul.f32 %v15, %v17
    %v19 = vadd.f32 %v15, %v18
    %vm20 = vweird.f32 %v13
    %vm21 = vweird.f32 %v15
    %vm22 = vmor %vm20, %vm21
    %v23 = vsel %vm22, %v15, %v19
    %v24 = vand.u32 2147483647, %v13
    %vm25 = vcmp.eq.f32.partialorder %v24, 8.507059e+37
    %v26 = vand.u32 %v13, 2147483648
    %v27 = vor.u32 1.1754944e-38, %v26
    %v28 = vsel %vm25, %v27, %v23
    %v30 = vrot.slane %v28, 7
    %v32 = vmul.f32 %v14, %v30
    %v33 = vadd.f32 %v13, 1.0
    %v34 = vlog2.pop %v33
    %v35 = vmul.f32 %v34, 0.6931472
    %v36 = vmul.f32 -0.5, %v13
    %v37 = vadd.f32 %v36, 1.0
    %v38 = vmul.f32 %v37, %v13
    %v39 = vand.u32 2147483647, %v13
    %vm40 = vcmp.lt.f32.partialorder %v39, 0.0004427343
    %v41 = vsel %vm40, %v38, %v35
    %v43 = vrot.slane %v41, 7
    %v45 = vadd.f32 %v32, %v43
    %v46 = vmax.f32 %v45, 0.0
    %vm47 = vcmask 17409
    %48 = vst.msk [vmem:[#allocation2 - $0x1] sm:$0x2] %vm47, %v46
    %v50 = vrot.slane %v46, 1
    %vm52 = vcmask 16384
    %v53 = vsel %vm52, %v50, 0.0
    %54 = vadd.xlane.f32.xlu0 %v53
    %v55 = vpop.xlane.xlu0 %54
    %v56 = vrot.slane %v55, 4
    %v57 = vadd.f32 %v55, %v56
    %v58 = vrot.slane %v57, 2
    %v59 = vadd.f32 %v57, %v58
    %v60 = vrot.slane %v59, 1
    %v61 = vadd.f32 %v59, %v60
    %s62 = vtos %v61
    %s63 = scalar_lea.smem [#allocation5], 0
    %64 = sst [smem:[%s63]] %s62
    // Predicated region
    $region6: #{automatic_weighted_loss.1} parent=1 // pred_check
      _
    $region7: #{automatic_weighted_loss.1} parent=1 // pred_check_branch
      %66 = sbr.rel (0) target = $region9
    $region8: #{automatic_weighted_loss.1} parent=1 // pred_region
      %68 = vsyncadd [#allocation3], 0
      %s70 = sshll.u32 [#allocation2], 4
      %s71 = int_to_ptr.vmem [resolvable:$true] %s70
      %s72 = sshll.u32 %s1, 4
      %s73 = int_to_ptr.hbm [resolvable:$true] %s72
      %75 = dma.vmem_to_hbm [thread:$0]  %s71, 16, %s73, [#allocation3]
    $region9: #{automatic_weighted_loss.1} parent=1 // pred_fallthru
      _
    // Predicated region
    $region10: #{automatic_weighted_loss.1} parent=1 // pred_check
      _
    $region11: #{automatic_weighted_loss.1} parent=1 // pred_check_branch
      %77 = sbr.rel (0) target = $region13
    $region12: #{automatic_weighted_loss.1} parent=1 // pred_region
      %79 = vsyncadd [#allocation4], 0
      %s81 = sshll.u32 %s2, 4
      %s82 = int_to_ptr.hbm [resolvable:$true] %s81
      %84 = dma.smem_to_hbm [#allocation5], 16, %s82, [#allocation4]
    $region13: #{automatic_weighted_loss.1} parent=1 // pred_fallthru
      _
    // Predicated region
    $region14: #{automatic_weighted_loss.1} parent=1 // pred_check
      _
    $region15: #{automatic_weighted_loss.1} parent=1 // pred_check_branch
      %86 = sbr.rel (0) target = $region17
    $region16: #{automatic_weighted_loss.1} parent=1 // pred_region
      %88 = dma.done [#allocation3], 16
    $region17: #{automatic_weighted_loss.1} parent=1 // pred_fallthru
      _
    // Predicated region
    $region18: #{automatic_weighted_loss.1} parent=1 // pred_check
      _
    $region19: #{automatic_weighted_loss.1} parent=1 // pred_check_branch
      %90 = sbr.rel (0) target = $region21
    $region20: #{automatic_weighted_loss.1} parent=1 // pred_region
      %92 = dma.done [#allocation4], 16
    $region21: #{automatic_weighted_loss.1} parent=1 // pred_fallthru
      _
    %93 = sfence
    %94 = vsyncpa [#allocation3], 1
    %95 = vsyncpa [#allocation4], 1

</llo_original>
